<compile_context>
chip_gen: v6e
topology: v6e:2x2x1
jax: 0.10.0
libtpu: 0.0.40
codegen_flags: <defaults>
</compile_context>

<pallas_src>
import functools

import jax
import jax.numpy as jnp
from jax.experimental import pallas as pl
from jax.experimental.pallas import tpu as pltpu


def _round_up(x: int, m: int) -> int:
    return ((x + m - 1) // m) * m


def _device_kind() -> str:
    try:
        return jax.devices()[0].device_kind.lower()
    except Exception:
        return ""


def _bf16_transcendentals_supported() -> bool:
    # v6e / v7x have bf16 VPU+EUP paths; v2-v5 do not (bf16 sigmoid/tanh would be a
    # pessimization there).
    kind = _device_kind()
    return not any(t in kind for t in ("v2", "v3", "v4", "v5"))


def _num_tensorcores() -> int:
    kind = _device_kind()
    return 2 if ("v7" in kind or "7x" in kind) else 1


# ---------------------------------------------------------------------------
# Kernel
# ---------------------------------------------------------------------------
def _posterior_kernel(
    x_ref,       # (TB, Cp)       bf16   packed [obs | act | 0-pad]
    hprev_ref,   # (TB, Hp)       f32    padded hidden; padded lanes are 0
    w1_ref,      # (Cp, Rp)       bf16
    b1_ref,      # (1, Rp)        f32
    wgx_ref,     # (Rp, 4*Hp)     bf16   cols [r | z | n_input | 0]
    wgh_ref,     # (Hp, 4*Hp)     bf16   cols [r | z | 0 | n_hidden]
    bg_ref,      # (1, 4*Hp)      f32    [b_r(sum) | b_z(sum) | b_in | b_hn]
    whd_ref,     # (Hp, 2*Sp)     bf16   [mean | std_linear]
    bhd_ref,     # (1, 2*Sp)      f32
    hnew_ref,    # out: (TB, Hp)  f32
    mean_ref,    # out: (TB, Sp)  f32
    std_ref,     # out: (TB, Sp)  f32
    *,
    hp: int,
    sp: int,
    min_std: float,
    bf16_gates: bool,
):
    f32, bf16 = jnp.float32, jnp.bfloat16

    x = x_ref[...]                                 # bf16 (TB, Cp)
    h_prev = hprev_ref[...]                        # f32  (TB, Hp), padded lanes 0

    # fc_obs_action: one aligned-K matmul (+bias, ReLU). Accumulate in f32.
    pre = jnp.dot(x, w1_ref[...], preferred_element_type=f32) + b1_ref[...]
    rnn_in = jnp.maximum(pre, 0.0)                 # (TB, Rp); padded lanes stay 0

    # GRU gate pre-activations: two matmuls summed in the f32 accumulator.
    # (same total MXU K as a fused [rnn_in | h_prev] matmul, but no concat scratch.)
    g = (jnp.dot(rnn_in.astype(bf16), wgx_ref[...], preferred_element_type=f32)
         + jnp.dot(h_prev.astype(bf16), wgh_ref[...], preferred_element_type=f32)
         + bg_ref[...])                            # (TB, 4*Hp) f32

    # All slices are on 128-lane boundaries (hp is a multiple of 128).
    if bf16_gates:
        # bf16 EUP path (v6e / v7x): sigmoid / tanh in bf16, blend kept in f32.
        gb = g.astype(bf16)
        r = jax.nn.sigmoid(gb[:, 0 * hp:1 * hp])
        z = jax.nn.sigmoid(gb[:, 1 * hp:2 * hp]).astype(f32)
        n = jnp.tanh(gb[:, 2 * hp:3 * hp] + r * gb[:, 3 * hp:4 * hp]).astype(f32)
    else:
        r = jax.nn.sigmoid(g[:, 0 * hp:1 * hp])
        z = jax.nn.sigmoid(g[:, 1 * hp:2 * hp])
        n = jnp.tanh(g[:, 2 * hp:3 * hp] + r * g[:, 3 * hp:4 * hp])

    # GRU blend in f32. Padded lanes: z=0.5, n=0, h_prev=0 -> stay exactly 0.
    h_new = (1.0 - z) * n + z * h_prev             # (TB, Hp) f32

    # Fused posterior heads: [mean | std_linear] in one matmul.
    hd = jnp.dot(h_new.astype(bf16), whd_ref[...], preferred_element_type=f32) + bhd_ref[...]
    mean = hd[:, 0:sp]
    s_lin = hd[:, sp:2 * sp]
    # numerically stable softplus: max(x, 0) + log1p(exp(-|x|))
    # (std's padded lanes hold softplus(0)+min_std; they are sliced off by the wrapper.)
    std = jnp.maximum(s_lin, 0.0) + jnp.log1p(jnp.exp(-jnp.abs(s_lin))) + min_std

    hnew_ref[...] = h_new
    mean_ref[...] = mean
    std_ref[...] = std


# ---------------------------------------------------------------------------
# Parameter initialisation / packing (padding & fusion done once, off the hot path)
# ---------------------------------------------------------------------------
def init_params(key, observation_dim, action_dim, state_dim, rnn_hidden_dim, rnn_input_dim):
    """Logical f32 parameters, weights stored as (in, out) (transpose of nn.Linear)."""
    ks = jax.random.split(key, 10)

    def w(k, shape, scale=0.1):
        return (scale * jax.random.normal(k, shape)).astype(jnp.float32)

    in_cat = observation_dim + action_dim
    return {
        "w1": w(ks[0], (in_cat, rnn_input_dim)),
        "b1": w(ks[1], (1, rnn_input_dim)),
        # GRUCell, gate order [r, z, n]
        "wih": w(ks[2], (rnn_input_dim, 3 * rnn_hidden_dim)),
        "bih": w(ks[3], (1, 3 * rnn_hidden_dim)),
        "whh": w(ks[4], (rnn_hidden_dim, 3 * rnn_hidden_dim)),
        "bhh": w(ks[5], (1, 3 * rnn_hidden_dim)),
        "wm": w(ks[6], (rnn_hidden_dim, state_dim)),
        "bm": w(ks[7], (1, state_dim)),
        "ws": w(ks[8], (rnn_hidden_dim, state_dim)),
        "bs": w(ks[9], (1, state_dim)),
    }


def pack_params(params, observation_dim, action_dim, state_dim, rnn_hidden_dim, rnn_input_dim):
    """Pad every gate/head block to a 128-lane boundary, split the GRU weight into input/hidden
    paths with a shared [r | z | n_i | n_h] column layout, pre-sum the r/z biases, cast weights
    to bf16 (biases stay f32)."""
    R, H, S = rnn_input_dim, rnn_hidden_dim, state_dim
    Cin = observation_dim + action_dim
    Cp = _round_up(Cin, 128)
    Rp, Hp, Sp = _round_up(R, 128), _round_up(H, 128), _round_up(S, 128)
    f32, bf16 = jnp.float32, jnp.bfloat16

    w1p = jnp.zeros((Cp, Rp), f32).at[:Cin, :R].set(params["w1"])
    b1p = jnp.zeros((1, Rp), f32).at[:, :R].set(params["b1"])

    wih, whh = params["wih"], params["whh"]
    bih, bhh = params["bih"], params["bhh"]

    # Input-path gate weight: columns [r | z | n_input | 0], each Hp wide.
    wgx = jnp.zeros((Rp, 4 * Hp), f32)
    wgx = wgx.at[:R, 0:H].set(wih[:, 0:H])
    wgx = wgx.at[:R, Hp:Hp + H].set(wih[:, H:2 * H])
    wgx = wgx.at[:R, 2 * Hp:2 * Hp + H].set(wih[:, 2 * H:3 * H])

    # Hidden-path gate weight: columns [r | z | 0 | n_hidden].
    wgh = jnp.zeros((Hp, 4 * Hp), f32)
    wgh = wgh.at[:H, 0:H].set(whh[:, 0:H])
    wgh = wgh.at[:H, Hp:Hp + H].set(whh[:, H:2 * H])
    wgh = wgh.at[:H, 3 * Hp:3 * Hp + H].set(whh[:, 2 * H:3 * H])

    bg = jnp.zeros((1, 4 * Hp), f32)
    bg = bg.at[:, 0:H].set(bih[:, 0:H] + bhh[:, 0:H])                 # r: b_ir + b_hr
    bg = bg.at[:, Hp:Hp + H].set(bih[:, H:2 * H] + bhh[:, H:2 * H])   # z: b_iz + b_hz
    bg = bg.at[:, 2 * Hp:2 * Hp + H].set(bih[:, 2 * H:3 * H])         # n (input):  b_in
    bg = bg.at[:, 3 * Hp:3 * Hp + H].set(bhh[:, 2 * H:3 * H])         # n (hidden): b_hn

    whd = jnp.zeros((Hp, 2 * Sp), f32)
    whd = whd.at[:H, 0:S].set(params["wm"])
    whd = whd.at[:H, Sp:Sp + S].set(params["ws"])
    bhd = jnp.zeros((1, 2 * Sp), f32)
    bhd = bhd.at[:, 0:S].set(params["bm"])
    bhd = bhd.at[:, Sp:Sp + S].set(params["bs"])

    return {
        "w1": w1p.astype(bf16), "b1": b1p,
        "wgx": wgx.astype(bf16), "wgh": wgh.astype(bf16), "bg": bg,
        "whd": whd.astype(bf16), "bhd": bhd,
    }


# ---------------------------------------------------------------------------
# Wrapper
# ---------------------------------------------------------------------------
def posterior_forward(packed, prev_rnn_hidden, prev_action, observation, *,
                      rnn_hidden_dim, state_dim, min_std=0.01,
                      batch_tile=None, bf16_gates=None,
                      alias_hidden=False, return_padded=False):
    B = observation.shape[0]
    H, S = rnn_hidden_dim, state_dim
    Cp, Rp = packed["w1"].shape
    Hp = packed["wgh"].shape[0]
    Sp = packed["whd"].shape[1] // 2

    if bf16_gates is None:
        bf16_gates = _bf16_transcendentals_supported()

    # Pack obs|act into one zero-padded bf16 input (tiny fused XLA pad) -> single
    # lane-aligned K=Cp matmul for fc1 inside the kernel.
    x = jnp.concatenate([observation, prev_action], axis=1)
    if x.shape[1] < Cp:
        x = jnp.pad(x, ((0, 0), (0, Cp - x.shape[1])))
    x = x.astype(jnp.bfloat16)

    # Pad the hidden state to the lane-aligned width with zeros (no-op if the caller
    # carries the padded state across timesteps — the recommended recurrent usage).
    if prev_rnn_hidden.shape[1] != Hp:
        prev_rnn_hidden = jnp.pad(
            prev_rnn_hidden, ((0, 0), (0, Hp - prev_rnn_hidden.shape[1])))
    prev_rnn_hidden = prev_rnn_hidden.astype(jnp.float32)

    # Batch tile: up to 256 rows (fills the 256x256 MXU on v6e/v7x); on v7x make sure the
    # "parallel" batch axis yields >= 2 grid tiles so both TensorCores are used.
    if batch_tile is not None:
        TB = batch_tile
    else:
        TB = min(_round_up(B, 8), 256)
        n_tc = _num_tensorcores()
        if n_tc > 1 and B >= 16 and pl.cdiv(B, TB) < n_tc:
            TB = _round_up(pl.cdiv(B, n_tc), 8)
    grid = (pl.cdiv(B, TB),)
    # NOTE: if B % TB != 0 the last tile computes on out-of-bounds padded rows; those
    # results are discarded by Pallas (harmless garbage).

    def batch_spec(cols):
        return pl.BlockSpec((TB, cols), lambda i: (i, 0))

    def full_spec(arr):
        return pl.BlockSpec(arr.shape, lambda i: (0, 0))

    kernel = functools.partial(_posterior_kernel, hp=Hp, sp=Sp,
                               min_std=float(min_std), bf16_gates=bool(bf16_gates))

    in_arrays = (x, prev_rnn_hidden,
                 packed["w1"], packed["b1"],
                 packed["wgx"], packed["wgh"], packed["bg"],
                 packed["whd"], packed["bhd"])
    in_specs = [batch_spec(Cp), batch_spec(Hp)]
    in_specs += [full_spec(a) for a in in_arrays[2:]]

    out_shape = (jax.ShapeDtypeStruct((B, Hp), jnp.float32),
                 jax.ShapeDtypeStruct((B, Sp), jnp.float32),
                 jax.ShapeDtypeStruct((B, Sp), jnp.float32))
    out_specs = (batch_spec(Hp), batch_spec(Sp), batch_spec(Sp))

    # VMEM budget from actual buffer sizes (double-buffered) instead of a hard-coded limit;
    # clamped to stay within v7x's 64 MiB physical VMEM.
    weight_bytes = sum(int(a.size) * a.dtype.itemsize for a in in_arrays[2:])
    act_bytes = TB * (Cp * 2 + Hp * 4)                       # inputs per buffer
    out_bytes = TB * (Hp * 4 + 2 * Sp * 4)                   # outputs per buffer
    interm_bytes = TB * (Rp * 4 + 4 * Hp * 4 + 2 * Sp * 4)   # rnn_in, g, hd
    vmem_limit = 2 * weight_bytes + 2 * (act_bytes + out_bytes) + 2 * interm_bytes + (4 << 20)
    vmem_limit = max(32 << 20, min(vmem_limit, 64 << 20))

    # Optionally alias the (padded) previous hidden with the new hidden for in-place
    # recurrent updates (caller should donate the buffer when jitting the rollout).
    io_aliases = {1: 0} if alias_hidden else {}

    h_pad, mean_pad, std_pad = pl.pallas_call(
        kernel,
        grid=grid,
        in_specs=in_specs,
        out_specs=out_specs,
        out_shape=out_shape,
        input_output_aliases=io_aliases,
        compiler_params=pltpu.CompilerParams(
            dimension_semantics=("parallel",),
            vmem_limit_bytes=int(vmem_limit),
        ),
    )(*in_arrays)

    if return_padded:
        # Recommended for rollouts: no per-step XLA slice copies; padded hidden lanes are 0.
        return h_pad, (mean_pad, std_pad)
    return h_pad[:, :H], (mean_pad[:, :S], std_pad[:, :S])


# ---------------------------------------------------------------------------
# Pure-JAX reference (f32) for correctness checking
# ---------------------------------------------------------------------------
def _reference_forward(params, h_prev, a, o, min_std=0.01):
    x = jnp.concatenate([o, a], axis=1)
    rnn_in = jax.nn.relu(x @ params["w1"] + params["b1"])
    gi = rnn_in @ params["wih"] + params["bih"]
    gh = h_prev @ params["whh"] + params["bhh"]
    H = h_prev.shape[1]
    r = jax.nn.sigmoid(gi[:, :H] + gh[:, :H])
    z = jax.nn.sigmoid(gi[:, H:2 * H] + gh[:, H:2 * H])
    n = jnp.tanh(gi[:, 2 * H:] + r * gh[:, 2 * H:])
    h_new = (1.0 - z) * n + z * h_prev
    mean = h_new @ params["wm"] + params["bm"]
    std = jax.nn.softplus(h_new @ params["ws"] + params["bs"]) + min_std
    return h_new, mean, std


if __name__ == "__main__":
    # Small shapes consistent with the module's forward (single GRUCell step).
    B = 8
    observation_dim = 32
    action_dim = 16
    state_dim = 32
    rnn_hidden_dim = 32
    rnn_input_dim = 32
    min_std = 0.01

    key = jax.random.PRNGKey(0)
    kp, kh, ka, ko = jax.random.split(key, 4)

    params = init_params(kp, observation_dim, action_dim, state_dim,
                         rnn_hidden_dim, rnn_input_dim)
    packed = pack_params(params, observation_dim, action_dim, state_dim,
                         rnn_hidden_dim, rnn_input_dim)

    prev_rnn_hidden = jax.random.normal(kh, (B, rnn_hidden_dim), dtype=jnp.float32)
    prev_action = jax.random.normal(ka, (B, action_dim), dtype=jnp.float32)
    observation = jax.random.normal(ko, (B, observation_dim), dtype=jnp.float32)

    h_new, (mean, std) = posterior_forward(
        packed, prev_rnn_hidden, prev_action, observation,
        rnn_hidden_dim=rnn_hidden_dim, state_dim=state_dim, min_std=min_std)
    jax.block_until_ready((h_new, mean, std))

    # Reference: f32 math on the same bf16-rounded weights the kernel consumes
    # (isolates structural correctness from bf16 quantisation of parameters/activations).
    params_q = {k: (v.astype(jnp.bfloat16).astype(jnp.float32) if k.startswith("w") else v)
                for k, v in params.items()}
    h_ref, m_ref, s_ref = _reference_forward(
        params_q, prev_rnn_hidden, prev_action, observation, min_std=min_std)

    assert h_new.shape == (B, rnn_hidden_dim)
    assert mean.shape == (B, state_dim) and std.shape == (B, state_dim)
    assert jnp.allclose(h_new, h_ref, atol=3e-2, rtol=3e-2)
    assert jnp.allclose(mean, m_ref, atol=3e-2, rtol=3e-2)
    assert jnp.allclose(std, s_ref, atol=3e-2, rtol=3e-2)

    print("KERNEL_OK")
</pallas_src>

<mosaic_0001>
module attributes {stable_mosaic.version = 11 : i64} {
  func.func @_posterior_kernel(%arg0: i32, %arg1: memref<8x128xbf16, #tpu.memory_space<vmem>>, %arg2: memref<8x128xf32, #tpu.memory_space<vmem>>, %arg3: memref<128x128xbf16, #tpu.memory_space<vmem>>, %arg4: memref<1x128xf32, #tpu.memory_space<vmem>>, %arg5: memref<128x512xbf16, #tpu.memory_space<vmem>>, %arg6: memref<128x512xbf16, #tpu.memory_space<vmem>>, %arg7: memref<1x512xf32, #tpu.memory_space<vmem>>, %arg8: memref<128x256xbf16, #tpu.memory_space<vmem>>, %arg9: memref<1x256xf32, #tpu.memory_space<vmem>>, %arg10: memref<8x128xf32, #tpu.memory_space<vmem>>, %arg11: memref<8x128xf32, #tpu.memory_space<vmem>>, %arg12: memref<8x128xf32, #tpu.memory_space<vmem>>) attributes {dimension_semantics = [#tpu.dimension_semantics<parallel>], iteration_bounds = array<i64: 1>, scalar_prefetch = 0 : i64, scratch_operands = 0 : i64, tpu.core_type = #tpu.core_type<tc>, window_params = [{transform_indices = @transform_0, window_bounds = array<i64: 8, 128>}, {transform_indices = @transform_1, window_bounds = array<i64: 8, 128>}, {pipeline_mode = #tpu.pipeline_mode<synchronous>, transform_indices = @transform_2, window_bounds = array<i64: 128, 128>}, {pipeline_mode = #tpu.pipeline_mode<synchronous>, transform_indices = @transform_3, window_bounds = array<i64: 1, 128>}, {pipeline_mode = #tpu.pipeline_mode<synchronous>, transform_indices = @transform_4, window_bounds = array<i64: 128, 512>}, {pipeline_mode = #tpu.pipeline_mode<synchronous>, transform_indices = @transform_5, window_bounds = array<i64: 128, 512>}, {pipeline_mode = #tpu.pipeline_mode<synchronous>, transform_indices = @transform_6, window_bounds = array<i64: 1, 512>}, {pipeline_mode = #tpu.pipeline_mode<synchronous>, transform_indices = @transform_7, window_bounds = array<i64: 128, 256>}, {pipeline_mode = #tpu.pipeline_mode<synchronous>, transform_indices = @transform_8, window_bounds = array<i64: 1, 256>}, {transform_indices = @transform_9, window_bounds = array<i64: 8, 128>}, {transform_indices = @transform_10, window_bounds = array<i64: 8, 128>}, {transform_indices = @transform_11, window_bounds = array<i64: 8, 128>}]} {
    %c0 = arith.constant 0 : index
    %c0_0 = arith.constant 0 : index
    %0 = vector.load %arg1[%c0, %c0_0] : memref<8x128xbf16, #tpu.memory_space<vmem>>, vector<8x128xbf16>
    %c0_1 = arith.constant 0 : index
    %c0_2 = arith.constant 0 : index
    %1 = vector.load %arg2[%c0_1, %c0_2] : memref<8x128xf32, #tpu.memory_space<vmem>>, vector<8x128xf32>
    %c0_3 = arith.constant 0 : index
    %c0_4 = arith.constant 0 : index
    %2 = vector.load %arg3[%c0_3, %c0_4] : memref<128x128xbf16, #tpu.memory_space<vmem>>, vector<128x128xbf16>
    %cst = arith.constant dense<0.000000e+00> : vector<8x128xf32>
    %3 = tpu.matmul %0, %2, %cst {dimension_numbers = #tpu.dot_dimension_numbers<[1], [0], [0], [1], [0, 0, 1, 1], [], []>} : vector<8x128xbf16>, vector<128x128xbf16>, vector<8x128xf32> -> vector<8x128xf32>
    %c0_5 = arith.constant 0 : index
    %c0_6 = arith.constant 0 : index
    %4 = vector.load %arg4[%c0_5, %c0_6] : memref<1x128xf32, #tpu.memory_space<vmem>>, vector<1x128xf32>
    %5 = vector.broadcast %4 : vector<1x128xf32> to vector<8x128xf32>
    %6 = arith.addf %3, %5 : vector<8x128xf32>
    %cst_7 = arith.constant 0.000000e+00 : f32
    %7 = vector.broadcast %cst_7 : f32 to vector<8x128xf32>
    %8 = arith.maximumf %6, %7 : vector<8x128xf32>
    %9 = arith.truncf %8 : vector<8x128xf32> to vector<8x128xbf16>
    %c0_8 = arith.constant 0 : index
    %c0_9 = arith.constant 0 : index
    %10 = vector.load %arg5[%c0_8, %c0_9] : memref<128x512xbf16, #tpu.memory_space<vmem>>, vector<128x512xbf16>
    %cst_10 = arith.constant dense<0.000000e+00> : vector<8x512xf32>
    %11 = tpu.matmul %9, %10, %cst_10 {dimension_numbers = #tpu.dot_dimension_numbers<[1], [0], [0], [1], [0, 0, 1, 1], [], []>} : vector<8x128xbf16>, vector<128x512xbf16>, vector<8x512xf32> -> vector<8x512xf32>
    %12 = arith.truncf %1 : vector<8x128xf32> to vector<8x128xbf16>
    %c0_11 = arith.constant 0 : index
    %c0_12 = arith.constant 0 : index
    %13 = vector.load %arg6[%c0_11, %c0_12] : memref<128x512xbf16, #tpu.memory_space<vmem>>, vector<128x512xbf16>
    %cst_13 = arith.constant dense<0.000000e+00> : vector<8x512xf32>
    %14 = tpu.matmul %12, %13, %cst_13 {dimension_numbers = #tpu.dot_dimension_numbers<[1], [0], [0], [1], [0, 0, 1, 1], [], []>} : vector<8x128xbf16>, vector<128x512xbf16>, vector<8x512xf32> -> vector<8x512xf32>
    %15 = arith.addf %11, %14 : vector<8x512xf32>
    %c0_14 = arith.constant 0 : index
    %c0_15 = arith.constant 0 : index
    %16 = vector.load %arg7[%c0_14, %c0_15] : memref<1x512xf32, #tpu.memory_space<vmem>>, vector<1x512xf32>
    %17 = vector.broadcast %16 : vector<1x512xf32> to vector<8x512xf32>
    %18 = arith.addf %15, %17 : vector<8x512xf32>
    %19 = arith.truncf %18 : vector<8x512xf32> to vector<8x512xbf16>
    %20 = vector.extract_strided_slice %19 {offsets = [0, 0], sizes = [8, 128], strides = [1, 1]} : vector<8x512xbf16> to vector<8x128xbf16>
    %21 = arith.negf %20 : vector<8x128xbf16>
    %22 = math.exp %21 : vector<8x128xbf16>
    %cst_16 = arith.constant 1.000000e+00 : bf16
    %23 = vector.broadcast %cst_16 : bf16 to vector<8x128xbf16>
    %24 = arith.addf %23, %22 : vector<8x128xbf16>
    %25 = arith.divf %23, %24 : vector<8x128xbf16>
    %26 = vector.extract_strided_slice %19 {offsets = [0, 128], sizes = [8, 128], strides = [1, 1]} : vector<8x512xbf16> to vector<8x128xbf16>
    %27 = arith.negf %26 : vector<8x128xbf16>
    %28 = math.exp %27 : vector<8x128xbf16>
    %cst_17 = arith.constant 1.000000e+00 : bf16
    %29 = vector.broadcast %cst_17 : bf16 to vector<8x128xbf16>
    %30 = arith.addf %29, %28 : vector<8x128xbf16>
    %31 = arith.divf %29, %30 : vector<8x128xbf16>
    %32 = arith.extf %31 : vector<8x128xbf16> to vector<8x128xf32>
    %33 = vector.extract_strided_slice %19 {offsets = [0, 256], sizes = [8, 128], strides = [1, 1]} : vector<8x512xbf16> to vector<8x128xbf16>
    %34 = vector.extract_strided_slice %19 {offsets = [0, 384], sizes = [8, 128], strides = [1, 1]} : vector<8x512xbf16> to vector<8x128xbf16>
    %35 = arith.mulf %25, %34 : vector<8x128xbf16>
    %36 = arith.addf %33, %35 : vector<8x128xbf16>
    %37 = math.tanh %36 : vector<8x128xbf16>
    %38 = arith.extf %37 : vector<8x128xbf16> to vector<8x128xf32>
    %cst_18 = arith.constant 1.000000e+00 : f32
    %39 = vector.broadcast %cst_18 : f32 to vector<8x128xf32>
    %40 = arith.subf %39, %32 : vector<8x128xf32>
    %41 = arith.mulf %40, %38 : vector<8x128xf32>
    %42 = arith.mulf %32, %1 : vector<8x128xf32>
    %43 = arith.addf %41, %42 : vector<8x128xf32>
    %44 = arith.truncf %43 : vector<8x128xf32> to vector<8x128xbf16>
    %c0_19 = arith.constant 0 : index
    %c0_20 = arith.constant 0 : index
    %45 = vector.load %arg8[%c0_19, %c0_20] : memref<128x256xbf16, #tpu.memory_space<vmem>>, vector<128x256xbf16>
    %cst_21 = arith.constant dense<0.000000e+00> : vector<8x256xf32>
    %46 = tpu.matmul %44, %45, %cst_21 {dimension_numbers = #tpu.dot_dimension_numbers<[1], [0], [0], [1], [0, 0, 1, 1], [], []>} : vector<8x128xbf16>, vector<128x256xbf16>, vector<8x256xf32> -> vector<8x256xf32>
    %c0_22 = arith.constant 0 : index
    %c0_23 = arith.constant 0 : index
    %47 = vector.load %arg9[%c0_22, %c0_23] : memref<1x256xf32, #tpu.memory_space<vmem>>, vector<1x256xf32>
    %48 = vector.broadcast %47 : vector<1x256xf32> to vector<8x256xf32>
    %49 = arith.addf %46, %48 : vector<8x256xf32>
    %50 = vector.extract_strided_slice %49 {offsets = [0, 0], sizes = [8, 128], strides = [1, 1]} : vector<8x256xf32> to vector<8x128xf32>
    %51 = vector.extract_strided_slice %49 {offsets = [0, 128], sizes = [8, 128], strides = [1, 1]} : vector<8x256xf32> to vector<8x128xf32>
    %cst_24 = arith.constant 0.000000e+00 : f32
    %52 = vector.broadcast %cst_24 : f32 to vector<8x128xf32>
    %53 = arith.maximumf %51, %52 : vector<8x128xf32>
    %54 = math.absf %51 : vector<8x128xf32>
    %cst_25 = arith.constant 0.000000e+00 : f32
    %55 = vector.broadcast %cst_25 : f32 to vector<8x128xf32>
    %56 = arith.subf %55, %54 : vector<8x128xf32>
    %57 = math.exp %56 : vector<8x128xf32>
    %58 = math.log1p %57 : vector<8x128xf32>
    %59 = arith.addf %53, %58 : vector<8x128xf32>
    %cst_26 = arith.constant 0.00999999977 : f32
    %60 = vector.broadcast %cst_26 : f32 to vector<8x128xf32>
    %61 = arith.addf %59, %60 : vector<8x128xf32>
    %c0_27 = arith.constant 0 : index
    %c0_28 = arith.constant 0 : index
    %62 = vector.load %arg10[%c0_27, %c0_28] : memref<8x128xf32, #tpu.memory_space<vmem>>, vector<8x128xf32>
    tpu.vector_store %arg10[%c0_27, %c0_28], %43 {strides = array<i32>} : memref<8x128xf32, #tpu.memory_space<vmem>>, vector<8x128xf32>,
    %c0_29 = arith.constant 0 : index
    %c0_30 = arith.constant 0 : index
    %63 = vector.load %arg11[%c0_29, %c0_30] : memref<8x128xf32, #tpu.memory_space<vmem>>, vector<8x128xf32>
    tpu.vector_store %arg11[%c0_29, %c0_30], %50 {strides = array<i32>} : memref<8x128xf32, #tpu.memory_space<vmem>>, vector<8x128xf32>,
    %c0_31 = arith.constant 0 : index
    %c0_32 = arith.constant 0 : index
    %64 = vector.load %arg12[%c0_31, %c0_32] : memref<8x128xf32, #tpu.memory_space<vmem>>, vector<8x128xf32>
    tpu.vector_store %arg12[%c0_31, %c0_32], %61 {strides = array<i32>} : memref<8x128xf32, #tpu.memory_space<vmem>>, vector<8x128xf32>,
    return
  }
  func.func @transform_0(%arg0: i32) -> (i32, i32) {
    %c0_i32 = arith.constant 0 : i32
    %c0_i32_0 = arith.constant 0 : i32
    return %arg0, %c0_i32 : i32, i32
  }
  func.func @transform_1(%arg0: i32) -> (i32, i32) {
    %c0_i32 = arith.constant 0 : i32
    %c0_i32_0 = arith.constant 0 : i32
    return %arg0, %c0_i32 : i32, i32
  }
  func.func @transform_2(%arg0: i32) -> (i32, i32) {
    %c0_i32 = arith.constant 0 : i32
    %c0_i32_0 = arith.constant 0 : i32
    %c0_i32_1 = arith.constant 0 : i32
    return %c0_i32, %c0_i32_0 : i32, i32
  }
  func.func @transform_3(%arg0: i32) -> (i32, i32) {
    %c0_i32 = arith.constant 0 : i32
    %c0_i32_0 = arith.constant 0 : i32
    %c0_i32_1 = arith.constant 0 : i32
    return %c0_i32, %c0_i32_0 : i32, i32
  }
  func.func @transform_4(%arg0: i32) -> (i32, i32) {
    %c0_i32 = arith.constant 0 : i32
    %c0_i32_0 = arith.constant 0 : i32
    %c0_i32_1 = arith.constant 0 : i32
    return %c0_i32, %c0_i32_0 : i32, i32
  }
  func.func @transform_5(%arg0: i32) -> (i32, i32) {
    %c0_i32 = arith.constant 0 : i32
    %c0_i32_0 = arith.constant 0 : i32
    %c0_i32_1 = arith.constant 0 : i32
    return %c0_i32, %c0_i32_0 : i32, i32
  }
  func.func @transform_6(%arg0: i32) -> (i32, i32) {
    %c0_i32 = arith.constant 0 : i32
    %c0_i32_0 = arith.constant 0 : i32
    %c0_i32_1 = arith.constant 0 : i32
    return %c0_i32, %c0_i32_0 : i32, i32
  }
  func.func @transform_7(%arg0: i32) -> (i32, i32) {
    %c0_i32 = arith.constant 0 : i32
    %c0_i32_0 = arith.constant 0 : i32
    %c0_i32_1 = arith.constant 0 : i32
    return %c0_i32, %c0_i32_0 : i32, i32
  }
  func.func @transform_8(%arg0: i32) -> (i32, i32) {
    %c0_i32 = arith.constant 0 : i32
    %c0_i32_0 = arith.constant 0 : i32
    %c0_i32_1 = arith.constant 0 : i32
    return %c0_i32, %c0_i32_0 : i32, i32
  }
  func.func @transform_9(%arg0: i32) -> (i32, i32) {
    %c0_i32 = arith.constant 0 : i32
    %c0_i32_0 = arith.constant 0 : i32
    return %arg0, %c0_i32 : i32, i32
  }
  func.func @transform_10(%arg0: i32) -> (i32, i32) {
    %c0_i32 = arith.constant 0 : i32
    %c0_i32_0 = arith.constant 0 : i32
    return %arg0, %c0_i32 : i32, i32
  }
  func.func @transform_11(%arg0: i32) -> (i32, i32) {
    %c0_i32 = arith.constant 0 : i32
    %c0_i32_0 = arith.constant 0 : i32
    return %arg0, %c0_i32 : i32, i32
  }
}

</mosaic_0001>

<llo_original>
// kernel: tpu_custom_call.1
$region0: #{tpu_custom_call.1}
  #allocation0 [shape = 'u32[]', space=smem, size = 0x4, offset = 0x4, fixed_abs, tag = 'smem constant byte address 0x4 - core index']
  #allocation1 [shape = 'u32[144,128]{1,0:T(1,128)}', space=vmem, size = 0x12000, scoped, tag = 'internal scratch']
  %s0 = inlined_call_operand.hbm [shape: bf16[8,128], index: 0, kind: input, shape index: {}]
  %s1 = inlined_call_operand.hbm [shape: f32[8,128], index: 1, kind: input, shape index: {}]
  %s2 = inlined_call_operand.hbm [shape: bf16[128,128], index: 2, kind: input, shape index: {}]
  %s3 = inlined_call_operand.vmem [shape: f32[1,128], index: 3, kind: input, shape index: {}]
  %s4 = inlined_call_operand.hbm [shape: bf16[128,512], index: 4, kind: input, shape index: {}]
  %s5 = inlined_call_operand.hbm [shape: bf16[128,512], index: 5, kind: input, shape index: {}]
  %s6 = inlined_call_operand.vmem [shape: f32[1,512], index: 6, kind: input, shape index: {}]
  %s7 = inlined_call_operand.hbm [shape: bf16[128,256], index: 7, kind: input, shape index: {}]
  %s8 = inlined_call_operand.vmem [shape: f32[1,256], index: 8, kind: input, shape index: {}]
  %s9 = inlined_call_operand.hbm [shape: f32[8,128], index: 9, kind: output, shape index: {0}]
  %s10 = inlined_call_operand.hbm [shape: f32[8,128], index: 10, kind: output, shape index: {1}]
  %s11 = inlined_call_operand.hbm [shape: f32[8,128], index: 11, kind: output, shape index: {2}]
  %12 = xla_tuple %s9, %s10, %s11
  %s13 = sld [smem:[#allocation0]]
  $region86: #{tpu_custom_call.1} parent=0
    _
  %s15 = ssub.s32 1, %s13
  %s16 = scalar_select 0, %s15, %s13
  $region1: #{tpu_custom_call.1} parent=0
    #allocation2 [shape = 'u8[2048]{0}', space=vmem, size = 0x800, scoped, tag = 'input window, operand 0, single buffered']
    #allocation3 [shape = 's32[1]{0}', space=sflag, size = 0x4, scoped, tag = 'scoped memory for tpu_custom_call.1']
    #allocation4 [shape = 's32[1]{0}', space=sflag, size = 0x4, scoped, tag = 'scoped memory for tpu_custom_call.1']
    #allocation5 [shape = 'u8[4096]{0}', space=vmem, size = 0x1000, scoped, tag = 'input window, operand 1, single buffered']
    #allocation6 [shape = 's32[1]{0}', space=sflag, size = 0x4, scoped, tag = 'scoped memory for tpu_custom_call.1']
    #allocation7 [shape = 'u8[32768]{0}', space=vmem, size = 0x8000, scoped, tag = 'input window, operand 2, single buffered']
    #allocation8 [shape = 'u8[131072]{0}', space=vmem, size = 0x20000, scoped, tag = 'input window, operand 4, single buffered']
    #allocation9 [shape = 's32[1]{0}', space=sflag, size = 0x4, scoped, tag = 'scoped memory for tpu_custom_call.1']
    #allocation10 [shape = 'u8[131072]{0}', space=vmem, size = 0x20000, scoped, tag = 'input window, operand 5, single buffered']
    #allocation11 [shape = 'u8[65536]{0}', space=vmem, size = 0x10000, scoped, tag = 'input window, operand 7, single buffered']
    #allocation12 [shape = 's32[1]{0}', space=sflag, size = 0x4, scoped, tag = 'scoped memory for tpu_custom_call.1']
    #allocation13 [shape = 'u8[4096]{0}', space=vmem, size = 0x1000, scoped, tag = 'output window, operand 0, single buffered']
    #allocation14 [shape = 'u8[4096]{0}', space=vmem, size = 0x1000, scoped, tag = 'output window, operand 1, single buffered']
    #allocation15 [shape = 's32[1]{0}', space=sflag, size = 0x4, scoped, tag = 'scoped memory for tpu_custom_call.1']
    #allocation16 [shape = 'u8[4096]{0}', space=vmem, size = 0x1000, scoped, tag = 'output window, operand 2, single buffered']
    %17 = vsyncpa [#allocation3], 0
    %18 = vsyncpa [#allocation6], 0
    %19 = vsyncpa [#allocation9], 0
    %20 = vsyncpa [#allocation12], 0
    %21 = vsyncpa [#allocation4], 0
    %22 = vsyncpa [#allocation15], 0
    // Predicated region
    $region2: #{tpu_custom_call.1} parent=1 // pred_check
      _
    $region3: #{tpu_custom_call.1} parent=1 // pred_check_branch
      %24 = sbr.rel (0) target = $region5
    $region4: #{tpu_custom_call.1} parent=1 // pred_region
      %s26 = ssub.s32 64, 64
      %27 = vsyncadd [#allocation3], %s26
      %s29 = sshll.u32 [#allocation2], 4
      %s30 = int_to_ptr.vmem [resolvable:$true] %s29
      %32 = dma.hbm_to_vmem [thread:$0]  %s0, 64, %s30, [#allocation3]
    $region5: #{tpu_custom_call.1} parent=1 // pred_fallthru
      _
    // Predicated region
    $region6: #{tpu_custom_call.1} parent=1 // pred_check
      _
    $region7: #{tpu_custom_call.1} parent=1 // pred_check_branch
      %34 = sbr.rel (0) target = $region9
    $region8: #{tpu_custom_call.1} parent=1 // pred_region
      %s36 = ssub.s32 128, 128
      %37 = vsyncadd [#allocation6], %s36
      %s39 = sshll.u32 [#allocation5], 4
      %s40 = int_to_ptr.vmem [resolvable:$true] %s39
      %42 = dma.hbm_to_vmem [thread:$0]  %s1, 128, %s40, [#allocation6]
    $region9: #{tpu_custom_call.1} parent=1 // pred_fallthru
      _
    // Predicated region
    $region10: #{tpu_custom_call.1} parent=1 // pred_check
      _
    $region11: #{tpu_custom_call.1} parent=1 // pred_check_branch
      %44 = sbr.rel (0) target = $region13
    $region12: #{tpu_custom_call.1} parent=1 // pred_region
      %s46 = ssub.s32 1024, 1024
      %47 = vsyncadd [#allocation6], %s46
      %s48 = sshll.u32 [#allocation7], 4
      %s49 = int_to_ptr.vmem [resolvable:$true] %s48
      %54 = dma.hbm_to_vmem [thread:$0]  %s2, 1024, %s49, [#allocation6], 64, 64, 4
    $region13: #{tpu_custom_call.1} parent=1 // pred_fallthru
      _
    // Predicated region
    $region14: #{tpu_custom_call.1} parent=1 // pred_check
      _
    $region15: #{tpu_custom_call.1} parent=1 // pred_check_branch
      %56 = sbr.rel (0) target = $region17
    $region16: #{tpu_custom_call.1} parent=1 // pred_region
      _
    $region17: #{tpu_custom_call.1} parent=1 // pred_fallthru
      _
    // Predicated region
    $region18: #{tpu_custom_call.1} parent=1 // pred_check
      _
    $region19: #{tpu_custom_call.1} parent=1 // pred_check_branch
      %58 = sbr.rel (0) target = $region21
    $region20: #{tpu_custom_call.1} parent=1 // pred_region
      %s60 = ssub.s32 4096, 4096
      %61 = vsyncadd [#allocation9], %s60
      %s62 = sshll.u32 [#allocation8], 4
      %s63 = int_to_ptr.vmem [resolvable:$true] %s62
      %68 = dma.hbm_to_vmem [thread:$0]  %s4, 4096, %s63, [#allocation9], 256, 256, 16
    $region21: #{tpu_custom_call.1} parent=1 // pred_fallthru
      _
    // Predicated region
    $region22: #{tpu_custom_call.1} parent=1 // pred_check
      _
    $region23: #{tpu_custom_call.1} parent=1 // pred_check_branch
      %70 = sbr.rel (0) target = $region25
    $region24: #{tpu_custom_call.1} parent=1 // pred_region
      %s72 = ssub.s32 4096, 4096
      %73 = vsyncadd [#allocation9], %s72
      %s74 = sshll.u32 [#allocation10], 4
      %s75 = int_to_ptr.vmem [resolvable:$true] %s74
      %80 = dma.hbm_to_vmem [thread:$0]  %s5, 4096, %s75, [#allocation9], 256, 256, 16
    $region25: #{tpu_custom_call.1} parent=1 // pred_fallthru
      _
    // Predicated region
    $region26: #{tpu_custom_call.1} parent=1 // pred_check
      _
    $region27: #{tpu_custom_call.1} parent=1 // pred_check_branch
      %82 = sbr.rel (0) target = $region29
    $region28: #{tpu_custom_call.1} parent=1 // pred_region
      _
    $region29: #{tpu_custom_call.1} parent=1 // pred_fallthru
      _
    // Predicated region
    $region30: #{tpu_custom_call.1} parent=1 // pred_check
      _
    $region31: #{tpu_custom_call.1} parent=1 // pred_check_branch
      %84 = sbr.rel (0) target = $region33
    $region32: #{tpu_custom_call.1} parent=1 // pred_region
      %s86 = ssub.s32 2048, 2048
      %87 = vsyncadd [#allocation12], %s86
      %s88 = sshll.u32 [#allocation11], 4
      %s89 = int_to_ptr.vmem [resolvable:$true] %s88
      %94 = dma.hbm_to_vmem [thread:$0]  %s7, 2048, %s89, [#allocation12], 128, 128, 8
    $region33: #{tpu_custom_call.1} parent=1 // pred_fallthru
      _
    // Predicated region
    $region34: #{tpu_custom_call.1} parent=1 // pred_check
      _
    $region35: #{tpu_custom_call.1} parent=1 // pred_check_branch
      %96 = sbr.rel (0) target = $region37
    $region36: #{tpu_custom_call.1} parent=1 // pred_region
      _
    $region37: #{tpu_custom_call.1} parent=1 // pred_fallthru
      _
    // Predicated region
    $region38: #{tpu_custom_call.1} parent=1 // pred_check
      _
    $region39: #{tpu_custom_call.1} parent=1 // pred_check_branch
      %98 = sbr.rel (0) target = $region41
    $region40: #{tpu_custom_call.1} parent=1 // pred_region
      %99 = dma.done [#allocation3], 64
    $region41: #{tpu_custom_call.1} parent=1 // pred_fallthru
      _
    // Predicated region
    $region42: #{tpu_custom_call.1} parent=1 // pred_check
      _
    $region43: #{tpu_custom_call.1} parent=1 // pred_check_branch
      %101 = sbr.rel (0) target = $region45
    $region44: #{tpu_custom_call.1} parent=1 // pred_region
      %102 = dma.done [#allocation6], 128
    $region45: #{tpu_custom_call.1} parent=1 // pred_fallthru
      _
    // Predicated region
    $region46: #{tpu_custom_call.1} parent=1 // pred_check
      _
    $region47: #{tpu_custom_call.1} parent=1 // pred_check_branch
      %104 = sbr.rel (0) target = $region49
    $region48: #{tpu_custom_call.1} parent=1 // pred_region
      %105 = dma.done [#allocation6], 1024
    $region49: #{tpu_custom_call.1} parent=1 // pred_fallthru
      _
    // Predicated region
    $region50: #{tpu_custom_call.1} parent=1 // pred_check
      _
    $region51: #{tpu_custom_call.1} parent=1 // pred_check_branch
      %107 = sbr.rel (0) target = $region53
    $region52: #{tpu_custom_call.1} parent=1 // pred_region
      %108 = dma.done [#allocation9], 4096
    $region53: #{tpu_custom_call.1} parent=1 // pred_fallthru
      _
    // Predicated region
    $region54: #{tpu_custom_call.1} parent=1 // pred_check
      _
    $region55: #{tpu_custom_call.1} parent=1 // pred_check_branch
      %110 = sbr.rel (0) target = $region57
    $region56: #{tpu_custom_call.1} parent=1 // pred_region
      %111 = dma.done [#allocation9], 4096
    $region57: #{tpu_custom_call.1} parent=1 // pred_fallthru
      _
    // Predicated region
    $region58: #{tpu_custom_call.1} parent=1 // pred_check
      _
    $region59: #{tpu_custom_call.1} parent=1 // pred_check_branch
      %113 = sbr.rel (0) target = $region61
    $region60: #{tpu_custom_call.1} parent=1 // pred_region
      %114 = dma.done [#allocation12], 2048
    $region61: #{tpu_custom_call.1} parent=1 // pred_fallthru
      _
    %v117 = vld [vmem:[#allocation2] sm:$0xf]
    %v118 = vld [vmem:[#allocation5] sm:$0xff]
    %v119 = vld [vmem:[#allocation7] sm:$0xf]
    %v120 = vld [vmem:[#allocation7 + $0x4] sm:$0xf]
    %v121 = vld [vmem:[#allocation7 + $0x8] sm:$0xf]
    %v122 = vld [vmem:[#allocation7 + $0xc] sm:$0xf]
    %v123 = vld [vmem:[#allocation7 + $0x10] sm:$0xf]
    %v124 = vld [vmem:[#allocation7 + $0x14] sm:$0xf]
    %v125 = vld [vmem:[#allocation7 + $0x18] sm:$0xf]
    %v126 = vld [vmem:[#allocation7 + $0x1c] sm:$0xf]
    %v127 = vld [vmem:[#allocation7 + $0x20] sm:$0xf]
    %v128 = vld [vmem:[#allocation7 + $0x24] sm:$0xf]
    %v129 = vld [vmem:[#allocation7 + $0x28] sm:$0xf]
    %v130 = vld [vmem:[#allocation7 + $0x2c] sm:$0xf]
    %v131 = vld [vmem:[#allocation7 + $0x30] sm:$0xf]
    %v132 = vld [vmem:[#allocation7 + $0x34] sm:$0xf]
    %v133 = vld [vmem:[#allocation7 + $0x38] sm:$0xf]
    %v134 = vld [vmem:[#allocation7 + $0x3c] sm:$0xf]
    %v135 = vld [vmem:[%s3] sm:$0x1]
    %v137 = vlaneseq
    %v138 = vshrl.u32 %v137, 7
    %v139 = vsub.s32 0, %v138
    %v140 = vrot.slane %v135, %v139
    %v158 = vunpack.c.l.b16 %v119
    %v159 = vunpack.c.l.b16 %v120
    %v160 = vunpack.c.l.b16 %v121
    %v161 = vunpack.c.l.b16 %v122
    %v162 = vunpack.c.l.b16 %v123
    %v163 = vunpack.c.l.b16 %v124
    %v164 = vunpack.c.l.b16 %v125
    %v165 = vunpack.c.l.b16 %v126
    %v166 = vunpack.c.l.b16 %v127
    %v167 = vunpack.c.l.b16 %v128
    %v168 = vunpack.c.l.b16 %v129
    %v169 = vunpack.c.l.b16 %v130
    %v170 = vunpack.c.l.b16 %v131
    %v171 = vunpack.c.l.b16 %v132
    %v172 = vunpack.c.l.b16 %v133
    %v173 = vunpack.c.l.b16 %v134
    %v174 = vpack.c.b16 %v159, %v158
    %v175 = vpack.c.b16 %v161, %v160
    %v176 = vpack.c.b16 %v163, %v162
    %v177 = vpack.c.b16 %v165, %v164
    %v178 = vpack.c.b16 %v167, %v166
    %v179 = vpack.c.b16 %v169, %v168
    %v180 = vpack.c.b16 %v171, %v170
    %v181 = vpack.c.b16 %v173, %v172
    %190 = vmatprep.subr.bf16.mxu0 0
    %191 = vmatpush1.bf16.msra.mxu0 %v181
    %192 = vmatprep.subr.bf16.mxu0 0
    %193 = vmatpush1.bf16.msra.mxu0 %v180
    %194 = vmatprep.subr.bf16.mxu0 0
    %195 = vmatpush1.bf16.msra.mxu0 %v179
    %196 = vmatprep.subr.bf16.mxu0 0
    %197 = vmatpush1.bf16.msra.mxu0 %v178
    %198 = vmatprep.subr.bf16.mxu0 0
    %199 = vmatpush1.bf16.msra.mxu0 %v177
    %200 = vmatprep.subr.bf16.mxu0 0
    %201 = vmatpush1.bf16.msra.mxu0 %v176
    %202 = vmatprep.subr.bf16.mxu0 0
    %203 = vmatpush1.bf16.msra.mxu0 %v175
    %204 = vmatprep.subr.bf16.mxu0 0
    %205 = vmatpush1.bf16.msra.mxu0 %v174
    %206 = vmatprep.subr.bf16.mxu0 0
    %207 = vmatpush2.bf16.msra.mxu0 0
    %208 = vmatprep.subr.bf16.mxu0 0
    %209 = vmatpush2.bf16.msra.mxu0 0
    %210 = vmatprep.subr.bf16.mxu0 0
    %211 = vmatpush2.bf16.msra.mxu0 0
    %212 = vmatprep.subr.bf16.mxu0 0
    %213 = vmatpush2.bf16.msra.mxu0 0
    %214 = vmatprep.subr.bf16.mxu0 0
    %215 = vmatpush2.bf16.msra.mxu0 0
    %216 = vmatprep.subr.bf16.mxu0 0
    %217 = vmatpush2.bf16.msra.mxu0 0
    %218 = vmatprep.subr.bf16.mxu0 0
    %219 = vmatpush2.bf16.msra.mxu0 0
    %220 = vmatprep.subr.bf16.mxu0 0
    %221 = vmatpush2.bf16.msra.mxu0 0
    %222 = vmatprep.mubr.bf16.mxu0 0
    %223 = vmatmul.mubr.bf16.gmra.mxu0 %v117
    %v224 = vpop.f32.mrf.mxu0
    %v225 = vadd.f32 %v140, %v224
    %v226 = vpop.f32.mrf.mxu0
    %v227 = vpop.f32.mrf.mxu0
    %v228 = vpop.f32.mrf.mxu0
    %229 = vdwg.mxu0
    %v230 = vmax.f32 %v225, 0.0
    %v231 = vpack.c.bf16 %v230, %v230
    %v232 = vld [vmem:[#allocation8] sm:$0xff]
    %v233 = vld [vmem:[#allocation8 + $0x8] sm:$0xff]
    %v234 = vld [vmem:[#allocation8 + $0x10] sm:$0xff]
    %v235 = vld [vmem:[#allocation8 + $0x18] sm:$0xff]
    %v236 = vld [vmem:[#allocation8 + $0x20] sm:$0xff]
    %v237 = vld [vmem:[#allocation8 + $0x28] sm:$0xff]
    %v238 = vld [vmem:[#allocation8 + $0x30] sm:$0xff]
    %v239 = vld [vmem:[#allocation8 + $0x38] sm:$0xff]
    %v240 = vld [vmem:[#allocation8 + $0x40] sm:$0xff]
    %v241 = vld [vmem:[#allocation8 + $0x48] sm:$0xff]
    %v242 = vld [vmem:[#allocation8 + $0x50] sm:$0xff]
    %v243 = vld [vmem:[#allocation8 + $0x58] sm:$0xff]
    %v244 = vld [vmem:[#allocation8 + $0x60] sm:$0xff]
    %v245 = vld [vmem:[#allocation8 + $0x68] sm:$0xff]
    %v246 = vld [vmem:[#allocation8 + $0x70] sm:$0xff]
    %v247 = vld [vmem:[#allocation8 + $0x78] sm:$0xff]
    %v248 = vld [vmem:[#allocation8 + $0x80] sm:$0xff]
    %v249 = vld [vmem:[#allocation8 + $0x88] sm:$0xff]
    %v250 = vld [vmem:[#allocation8 + $0x90] sm:$0xff]
    %v251 = vld [vmem:[#allocation8 + $0x98] sm:$0xff]
    %v252 = vld [vmem:[#allocation8 + $0xa0] sm:$0xff]
    %v253 = vld [vmem:[#allocation8 + $0xa8] sm:$0xff]
    %v254 = vld [vmem:[#allocation8 + $0xb0] sm:$0xff]
    %v255 = vld [vmem:[#allocation8 + $0xb8] sm:$0xff]
    %v256 = vld [vmem:[#allocation8 + $0xc0] sm:$0xff]
    %v257 = vld [vmem:[#allocation8 + $0xc8] sm:$0xff]
    %v258 = vld [vmem:[#allocation8 + $0xd0] sm:$0xff]
    %v259 = vld [vmem:[#allocation8 + $0xd8] sm:$0xff]
    %v260 = vld [vmem:[#allocation8 + $0xe0] sm:$0xff]
    %v261 = vld [vmem:[#allocation8 + $0xe8] sm:$0xff]
    %v262 = vld [vmem:[#allocation8 + $0xf0] sm:$0xff]
    %v263 = vld [vmem:[#allocation8 + $0xf8] sm:$0xff]
    %v264 = vpack.c.bf16 %v118, %v118
    %v265 = vld [vmem:[#allocation10] sm:$0xff]
    %v266 = vld [vmem:[#allocation10 + $0x8] sm:$0xff]
    %v267 = vld [vmem:[#allocation10 + $0x10] sm:$0xff]
    %v268 = vld [vmem:[#allocation10 + $0x18] sm:$0xff]
    %v269 = vld [vmem:[#allocation10 + $0x20] sm:$0xff]
    %v270 = vld [vmem:[#allocation10 + $0x28] sm:$0xff]
    %v271 = vld [vmem:[#allocation10 + $0x30] sm:$0xff]
    %v272 = vld [vmem:[#allocation10 + $0x38] sm:$0xff]
    %v273 = vld [vmem:[#allocation10 + $0x40] sm:$0xff]
    %v274 = vld [vmem:[#allocation10 + $0x48] sm:$0xff]
    %v275 = vld [vmem:[#allocation10 + $0x50] sm:$0xff]
    %v276 = vld [vmem:[#allocation10 + $0x58] sm:$0xff]
    %v277 = vld [vmem:[#allocation10 + $0x60] sm:$0xff]
    %v278 = vld [vmem:[#allocation10 + $0x68] sm:$0xff]
    %v279 = vld [vmem:[#allocation10 + $0x70] sm:$0xff]
    %v280 = vld [vmem:[#allocation10 + $0x78] sm:$0xff]
    %v281 = vld [vmem:[#allocation10 + $0x80] sm:$0xff]
    %v282 = vld [vmem:[#allocation10 + $0x88] sm:$0xff]
    %v283 = vld [vmem:[#allocation10 + $0x90] sm:$0xff]
    %v284 = vld [vmem:[#allocation10 + $0x98] sm:$0xff]
    %v285 = vld [vmem:[#allocation10 + $0xa0] sm:$0xff]
    %v286 = vld [vmem:[#allocation10 + $0xa8] sm:$0xff]
    %v287 = vld [vmem:[#allocation10 + $0xb0] sm:$0xff]
    %v288 = vld [vmem:[#allocation10 + $0xb8] sm:$0xff]
    %v289 = vld [vmem:[#allocation10 + $0xc0] sm:$0xff]
    %v290 = vld [vmem:[#allocation10 + $0xc8] sm:$0xff]
    %v291 = vld [vmem:[#allocation10 + $0xd0] sm:$0xff]
    %v292 = vld [vmem:[#allocation10 + $0xd8] sm:$0xff]
    %v293 = vld [vmem:[#allocation10 + $0xe0] sm:$0xff]
    %v294 = vld [vmem:[#allocation10 + $0xe8] sm:$0xff]
    %v295 = vld [vmem:[#allocation10 + $0xf0] sm:$0xff]
    %v296 = vld [vmem:[#allocation10 + $0xf8] sm:$0xff]
    %v329 = vunpack.c.l.b16 %v265
    %v330 = vunpack.c.h.b16 %v265
    %v331 = vunpack.c.l.b16 %v266
    %v332 = vunpack.c.h.b16 %v266
    %v333 = vunpack.c.l.b16 %v267
    %v334 = vunpack.c.h.b16 %v267
    %v335 = vunpack.c.l.b16 %v268
    %v336 = vunpack.c.h.b16 %v268
    %v337 = vunpack.c.l.b16 %v269
    %v338 = vunpack.c.h.b16 %v269
    %v339 = vunpack.c.l.b16 %v270
    %v340 = vunpack.c.h.b16 %v270
    %v341 = vunpack.c.l.b16 %v271
    %v342 = vunpack.c.h.b16 %v271
    %v343 = vunpack.c.l.b16 %v272
    %v344 = vunpack.c.h.b16 %v272
    %v345 = vunpack.c.l.b16 %v273
    %v346 = vunpack.c.h.b16 %v273
    %v347 = vunpack.c.l.b16 %v274
    %v348 = vunpack.c.h.b16 %v274
    %v349 = vunpack.c.l.b16 %v275
    %v350 = vunpack.c.h.b16 %v275
    %v351 = vunpack.c.l.b16 %v276
    %v352 = vunpack.c.h.b16 %v276
    %v353 = vunpack.c.l.b16 %v277
    %v354 = vunpack.c.h.b16 %v277
    %v355 = vunpack.c.l.b16 %v278
    %v356 = vunpack.c.h.b16 %v278
    %v357 = vunpack.c.l.b16 %v279
    %v358 = vunpack.c.h.b16 %v279
    %v359 = vunpack.c.l.b16 %v280
    %v360 = vunpack.c.h.b16 %v280
    %v361 = vunpack.c.l.b16 %v281
    %v362 = vunpack.c.h.b16 %v281
    %v363 = vunpack.c.l.b16 %v282
    %v364 = vunpack.c.h.b16 %v282
    %v365 = vunpack.c.l.b16 %v283
    %v366 = vunpack.c.h.b16 %v283
    %v367 = vunpack.c.l.b16 %v284
    %v368 = vunpack.c.h.b16 %v284
    %v369 = vunpack.c.l.b16 %v285
    %v370 = vunpack.c.h.b16 %v285
    %v371 = vunpack.c.l.b16 %v286
    %v372 = vunpack.c.h.b16 %v286
    %v373 = vunpack.c.l.b16 %v287
    %v374 = vunpack.c.h.b16 %v287
    %v375 = vunpack.c.l.b16 %v288
    %v376 = vunpack.c.h.b16 %v288
    %v377 = vunpack.c.l.b16 %v289
    %v378 = vunpack.c.h.b16 %v289
    %v379 = vunpack.c.l.b16 %v290
    %v380 = vunpack.c.h.b16 %v290
    %v381 = vunpack.c.l.b16 %v291
    %v382 = vunpack.c.h.b16 %v291
    %v383 = vunpack.c.l.b16 %v292
    %v384 = vunpack.c.h.b16 %v292
    %v385 = vunpack.c.l.b16 %v293
    %v386 = vunpack.c.h.b16 %v293
    %v387 = vunpack.c.l.b16 %v294
    %v388 = vunpack.c.h.b16 %v294
    %v389 = vunpack.c.l.b16 %v295
    %v390 = vunpack.c.h.b16 %v295
    %v391 = vunpack.c.l.b16 %v296
    %v392 = vunpack.c.h.b16 %v296
    %v393 = vpack.c.b16 %v333, %v329
    %v394 = vpack.c.b16 %v334, %v330
    %v395 = vpack.c.b16 %v335, %v331
    %v396 = vpack.c.b16 %v336, %v332
    %v397 = vpack.c.b16 %v341, %v337
    %v398 = vpack.c.b16 %v342, %v338
    %v399 = vpack.c.b16 %v343, %v339
    %v400 = vpack.c.b16 %v344, %v340
    %v401 = vpack.c.b16 %v349, %v345
    %v402 = vpack.c.b16 %v350, %v346
    %v403 = vpack.c.b16 %v351, %v347
    %v404 = vpack.c.b16 %v352, %v348
    %v405 = vpack.c.b16 %v357, %v353
    %v406 = vpack.c.b16 %v358, %v354
    %v407 = vpack.c.b16 %v359, %v355
    %v408 = vpack.c.b16 %v360, %v356
    %v409 = vpack.c.b16 %v365, %v361
    %v410 = vpack.c.b16 %v366, %v362
    %v411 = vpack.c.b16 %v367, %v363
    %v412 = vpack.c.b16 %v368, %v364
    %v413 = vpack.c.b16 %v373, %v369
    %v414 = vpack.c.b16 %v374, %v370
    %v415 = vpack.c.b16 %v375, %v371
    %v416 = vpack.c.b16 %v376, %v372
    %v417 = vpack.c.b16 %v381, %v377
    %v418 = vpack.c.b16 %v382, %v378
    %v419 = vpack.c.b16 %v383, %v379
    %v420 = vpack.c.b16 %v384, %v380
    %v421 = vpack.c.b16 %v389, %v385
    %v422 = vpack.c.b16 %v390, %v386
    %v423 = vpack.c.b16 %v391, %v387
    %v424 = vpack.c.b16 %v392, %v388
    %457 = vmatprep.subr.bf16.mxu0 %v422
    %458 = vmatpush1.bf16.msra.mxu0 %v421
    %459 = vmatprep.subr.bf16.mxu0 %v418
    %460 = vmatpush1.bf16.msra.mxu0 %v417
    %461 = vmatprep.subr.bf16.mxu0 %v414
    %462 = vmatpush1.bf16.msra.mxu0 %v413
    %463 = vmatprep.subr.bf16.mxu0 %v410
    %464 = vmatpush1.bf16.msra.mxu0 %v409
    %465 = vmatprep.subr.bf16.mxu0 %v406
    %466 = vmatpush1.bf16.msra.mxu0 %v405
    %467 = vmatprep.subr.bf16.mxu0 %v402
    %468 = vmatpush1.bf16.msra.mxu0 %v401
    %469 = vmatprep.subr.bf16.mxu0 %v398
    %470 = vmatpush1.bf16.msra.mxu0 %v397
    %471 = vmatprep.subr.bf16.mxu0 %v394
    %472 = vmatpush1.bf16.msra.mxu0 %v393
    %473 = vmatprep.subr.bf16.mxu0 0
    %474 = vmatpush2.bf16.msra.mxu0 0
    %475 = vmatprep.subr.bf16.mxu0 0
    %476 = vmatpush2.bf16.msra.mxu0 0
    %477 = vmatprep.subr.bf16.mxu0 0
    %478 = vmatpush2.bf16.msra.mxu0 0
    %479 = vmatprep.subr.bf16.mxu0 0
    %480 = vmatpush2.bf16.msra.mxu0 0
    %481 = vmatprep.subr.bf16.mxu0 0
    %482 = vmatpush2.bf16.msra.mxu0 0
    %483 = vmatprep.subr.bf16.mxu0 0
    %484 = vmatpush2.bf16.msra.mxu0 0
    %485 = vmatprep.subr.bf16.mxu0 0
    %486 = vmatpush2.bf16.msra.mxu0 0
    %487 = vmatprep.subr.bf16.mxu0 0
    %488 = vmatpush2.bf16.msra.mxu0 0
    %489 = vmatprep.mubr.bf16.mxu0 0
    %490 = vmatmul.mubr.bf16.gmra.mxu0 %v264
    %v491 = vpop.f32.mrf.mxu0
    %v492 = vadd.f32 0.0, %v491
    %v493 = vpop.f32.mrf.mxu0
    %v494 = vadd.f32 0.0, %v493
    %v495 = vpop.f32.mrf.mxu0
    %v496 = vpop.f32.mrf.mxu0
    %497 = vdwg.mxu0
    %498 = vmatprep.subr.bf16.mxu0 %v424
    %499 = vmatpush1.bf16.msra.mxu0 %v423
    %500 = vmatprep.subr.bf16.mxu0 %v420
    %501 = vmatpush1.bf16.msra.mxu0 %v419
    %502 = vmatprep.subr.bf16.mxu0 %v416
    %503 = vmatpush1.bf16.msra.mxu0 %v415
    %504 = vmatprep.subr.bf16.mxu0 %v412
    %505 = vmatpush1.bf16.msra.mxu0 %v411
    %506 = vmatprep.subr.bf16.mxu0 %v408
    %507 = vmatpush1.bf16.msra.mxu0 %v407
    %508 = vmatprep.subr.bf16.mxu0 %v404
    %509 = vmatpush1.bf16.msra.mxu0 %v403
    %510 = vmatprep.subr.bf16.mxu0 %v400
    %511 = vmatpush1.bf16.msra.mxu0 %v399
    %512 = vmatprep.subr.bf16.mxu0 %v396
    %513 = vmatpush1.bf16.msra.mxu0 %v395
    %514 = vmatprep.subr.bf16.mxu0 0
    %515 = vmatpush2.bf16.msra.mxu0 0
    %516 = vmatprep.subr.bf16.mxu0 0
    %517 = vmatpush2.bf16.msra.mxu0 0
    %518 = vmatprep.subr.bf16.mxu0 0
    %519 = vmatpush2.bf16.msra.mxu0 0
    %520 = vmatprep.subr.bf16.mxu0 0
    %521 = vmatpush2.bf16.msra.mxu0 0
    %522 = vmatprep.subr.bf16.mxu0 0
    %523 = vmatpush2.bf16.msra.mxu0 0
    %524 = vmatprep.subr.bf16.mxu0 0
    %525 = vmatpush2.bf16.msra.mxu0 0
    %526 = vmatprep.subr.bf16.mxu0 0
    %527 = vmatpush2.bf16.msra.mxu0 0
    %528 = vmatprep.subr.bf16.mxu0 0
    %529 = vmatpush2.bf16.msra.mxu0 0
    %530 = vmatprep.mubr.bf16.mxu0 0
    %531 = vmatmul.mubr.bf16.gmra.mxu0 %v264
    %v532 = vpop.f32.mrf.mxu0
    %v533 = vadd.f32 0.0, %v532
    %v534 = vpop.f32.mrf.mxu0
    %v535 = vadd.f32 0.0, %v534
    %v536 = vpop.f32.mrf.mxu0
    %v537 = vpop.f32.mrf.mxu0
    %538 = vdwg.mxu0
    %v571 = vunpack.c.l.b16 %v232
    %v572 = vunpack.c.h.b16 %v232
    %v573 = vunpack.c.l.b16 %v233
    %v574 = vunpack.c.h.b16 %v233
    %v575 = vunpack.c.l.b16 %v234
    %v576 = vunpack.c.h.b16 %v234
    %v577 = vunpack.c.l.b16 %v235
    %v578 = vunpack.c.h.b16 %v235
    %v579 = vunpack.c.l.b16 %v236
    %v580 = vunpack.c.h.b16 %v236
    %v581 = vunpack.c.l.b16 %v237
    %v582 = vunpack.c.h.b16 %v237
    %v583 = vunpack.c.l.b16 %v238
    %v584 = vunpack.c.h.b16 %v238
    %v585 = vunpack.c.l.b16 %v239
    %v586 = vunpack.c.h.b16 %v239
    %v587 = vunpack.c.l.b16 %v240
    %v588 = vunpack.c.h.b16 %v240
    %v589 = vunpack.c.l.b16 %v241
    %v590 = vunpack.c.h.b16 %v241
    %v591 = vunpack.c.l.b16 %v242
    %v592 = vunpack.c.h.b16 %v242
    %v593 = vunpack.c.l.b16 %v243
    %v594 = vunpack.c.h.b16 %v243
    %v595 = vunpack.c.l.b16 %v244
    %v596 = vunpack.c.h.b16 %v244
    %v597 = vunpack.c.l.b16 %v245
    %v598 = vunpack.c.h.b16 %v245
    %v599 = vunpack.c.l.b16 %v246
    %v600 = vunpack.c.h.b16 %v246
    %v601 = vunpack.c.l.b16 %v247
    %v602 = vunpack.c.h.b16 %v247
    %v603 = vunpack.c.l.b16 %v248
    %v604 = vunpack.c.h.b16 %v248
    %v605 = vunpack.c.l.b16 %v249
    %v606 = vunpack.c.h.b16 %v249
    %v607 = vunpack.c.l.b16 %v250
    %v608 = vunpack.c.h.b16 %v250
    %v609 = vunpack.c.l.b16 %v251
    %v610 = vunpack.c.h.b16 %v251
    %v611 = vunpack.c.l.b16 %v252
    %v612 = vunpack.c.h.b16 %v252
    %v613 = vunpack.c.l.b16 %v253
    %v614 = vunpack.c.h.b16 %v253
    %v615 = vunpack.c.l.b16 %v254
    %v616 = vunpack.c.h.b16 %v254
    %v617 = vunpack.c.l.b16 %v255
    %v618 = vunpack.c.h.b16 %v255
    %v619 = vunpack.c.l.b16 %v256
    %v620 = vunpack.c.h.b16 %v256
    %v621 = vunpack.c.l.b16 %v257
    %v622 = vunpack.c.h.b16 %v257
    %v623 = vunpack.c.l.b16 %v258
    %v624 = vunpack.c.h.b16 %v258
    %v625 = vunpack.c.l.b16 %v259
    %v626 = vunpack.c.h.b16 %v259
    %v627 = vunpack.c.l.b16 %v260
    %v628 = vunpack.c.h.b16 %v260
    %v629 = vunpack.c.l.b16 %v261
    %v630 = vunpack.c.h.b16 %v261
    %v631 = vunpack.c.l.b16 %v262
    %v632 = vunpack.c.h.b16 %v262
    %v633 = vunpack.c.l.b16 %v263
    %v634 = vunpack.c.h.b16 %v263
    %v635 = vpack.c.b16 %v575, %v571
    %v636 = vpack.c.b16 %v576, %v572
    %v637 = vpack.c.b16 %v577, %v573
    %v638 = vpack.c.b16 %v578, %v574
    %v639 = vpack.c.b16 %v583, %v579
    %v640 = vpack.c.b16 %v584, %v580
    %v641 = vpack.c.b16 %v585, %v581
    %v642 = vpack.c.b16 %v586, %v582
    %v643 = vpack.c.b16 %v591, %v587
    %v644 = vpack.c.b16 %v592, %v588
    %v645 = vpack.c.b16 %v593, %v589
    %v646 = vpack.c.b16 %v594, %v590
    %v647 = vpack.c.b16 %v599, %v595
    %v648 = vpack.c.b16 %v600, %v596
    %v649 = vpack.c.b16 %v601, %v597
    %v650 = vpack.c.b16 %v602, %v598
    %v651 = vpack.c.b16 %v607, %v603
    %v652 = vpack.c.b16 %v608, %v604
    %v653 = vpack.c.b16 %v609, %v605
    %v654 = vpack.c.b16 %v610, %v606
    %v655 = vpack.c.b16 %v615, %v611
    %v656 = vpack.c.b16 %v616, %v612
    %v657 = vpack.c.b16 %v617, %v613
    %v658 = vpack.c.b16 %v618, %v614
    %v659 = vpack.c.b16 %v623, %v619
    %v660 = vpack.c.b16 %v624, %v620
    %v661 = vpack.c.b16 %v625, %v621
    %v662 = vpack.c.b16 %v626, %v622
    %v663 = vpack.c.b16 %v631, %v627
    %v664 = vpack.c.b16 %v632, %v628
    %v665 = vpack.c.b16 %v633, %v629
    %v666 = vpack.c.b16 %v634, %v630
    %699 = vmatprep.subr.bf16.mxu0 %v664
    %700 = vmatpush1.bf16.msra.mxu0 %v663
    %701 = vmatprep.subr.bf16.mxu0 %v660
    %702 = vmatpush1.bf16.msra.mxu0 %v659
    %703 = vmatprep.subr.bf16.mxu0 %v656
    %704 = vmatpush1.bf16.msra.mxu0 %v655
    %705 = vmatprep.subr.bf16.mxu0 %v652
    %706 = vmatpush1.bf16.msra.mxu0 %v651
    %707 = vmatprep.subr.bf16.mxu0 %v648
    %708 = vmatpush1.bf16.msra.mxu0 %v647
    %709 = vmatprep.subr.bf16.mxu0 %v644
    %710 = vmatpush1.bf16.msra.mxu0 %v643
    %711 = vmatprep.subr.bf16.mxu0 %v640
    %712 = vmatpush1.bf16.msra.mxu0 %v639
    %713 = vmatprep.subr.bf16.mxu0 %v636
    %714 = vmatpush1.bf16.msra.mxu0 %v635
    %715 = vmatprep.subr.bf16.mxu0 0
    %716 = vmatpush2.bf16.msra.mxu0 0
    %717 = vmatprep.subr.bf16.mxu0 0
    %718 = vmatpush2.bf16.msra.mxu0 0
    %719 = vmatprep.subr.bf16.mxu0 0
    %720 = vmatpush2.bf16.msra.mxu0 0
    %721 = vmatprep.subr.bf16.mxu0 0
    %722 = vmatpush2.bf16.msra.mxu0 0
    %723 = vmatprep.subr.bf16.mxu0 0
    %724 = vmatpush2.bf16.msra.mxu0 0
    %725 = vmatprep.subr.bf16.mxu0 0
    %726 = vmatpush2.bf16.msra.mxu0 0
    %727 = vmatprep.subr.bf16.mxu0 0
    %728 = vmatpush2.bf16.msra.mxu0 0
    %729 = vmatprep.subr.bf16.mxu0 0
    %730 = vmatpush2.bf16.msra.mxu0 0
    %731 = vmatprep.mubr.bf16.mxu0 0
    %732 = vmatmul.mubr.bf16.gmra.mxu0 %v231
    %v733 = vpop.f32.mrf.mxu0
    %v734 = vadd.f32 %v492, %v733
    %v735 = vpop.f32.mrf.mxu0
    %v736 = vadd.f32 %v494, %v735
    %v737 = vpop.f32.mrf.mxu0
    %v738 = vpop.f32.mrf.mxu0
    %739 = vdwg.mxu0
    %740 = vmatprep.subr.bf16.mxu0 %v666
    %741 = vmatpush1.bf16.msra.mxu0 %v665
    %742 = vmatprep.subr.bf16.mxu0 %v662
    %743 = vmatpush1.bf16.msra.mxu0 %v661
    %744 = vmatprep.subr.bf16.mxu0 %v658
    %745 = vmatpush1.bf16.msra.mxu0 %v657
    %746 = vmatprep.subr.bf16.mxu0 %v654
    %747 = vmatpush1.bf16.msra.mxu0 %v653
    %748 = vmatprep.subr.bf16.mxu0 %v650
    %749 = vmatpush1.bf16.msra.mxu0 %v649
    %750 = vmatprep.subr.bf16.mxu0 %v646
    %751 = vmatpush1.bf16.msra.mxu0 %v645
    %752 = vmatprep.subr.bf16.mxu0 %v642
    %753 = vmatpush1.bf16.msra.mxu0 %v641
    %754 = vmatprep.subr.bf16.mxu0 %v638
    %755 = vmatpush1.bf16.msra.mxu0 %v637
    %756 = vmatprep.subr.bf16.mxu0 0
    %757 = vmatpush2.bf16.msra.mxu0 0
    %758 = vmatprep.subr.bf16.mxu0 0
    %759 = vmatpush2.bf16.msra.mxu0 0
    %760 = vmatprep.subr.bf16.mxu0 0
    %761 = vmatpush2.bf16.msra.mxu0 0
    %762 = vmatprep.subr.bf16.mxu0 0
    %763 = vmatpush2.bf16.msra.mxu0 0
    %764 = vmatprep.subr.bf16.mxu0 0
    %765 = vmatpush2.bf16.msra.mxu0 0
    %766 = vmatprep.subr.bf16.mxu0 0
    %767 = vmatpush2.bf16.msra.mxu0 0
    %768 = vmatprep.subr.bf16.mxu0 0
    %769 = vmatpush2.bf16.msra.mxu0 0
    %770 = vmatprep.subr.bf16.mxu0 0
    %771 = vmatpush2.bf16.msra.mxu0 0
    %772 = vmatprep.mubr.bf16.mxu0 0
    %773 = vmatmul.mubr.bf16.gmra.mxu0 %v231
    %v774 = vpop.f32.mrf.mxu0
    %v775 = vadd.f32 %v533, %v774
    %v776 = vpop.f32.mrf.mxu0
    %v777 = vadd.f32 %v535, %v776
    %v778 = vpop.f32.mrf.mxu0
    %v779 = vpop.f32.mrf.mxu0
    %780 = vdwg.mxu0
    %v781 = vld [vmem:[%s6] sm:$0xf]
    %v783 = vlaneseq
    %v784 = vshrl.u32 %v783, 7
    %v785 = vsub.s32 0, %v784
    %v786 = vrot.slane %v781, %v785
    %v787 = vlaneseq
    %v788 = vshrl.u32 %v787, 7
    %v789 = vsub.s32 1, %v788
    %v790 = vrot.slane %v781, %v789
    %v791 = vlaneseq
    %v792 = vshrl.u32 %v791, 7
    %v793 = vsub.s32 2, %v792
    %v794 = vrot.slane %v781, %v793
    %v795 = vlaneseq
    %v796 = vshrl.u32 %v795, 7
    %v797 = vsub.s32 3, %v796
    %v798 = vrot.slane %v781, %v797
    %v803 = vadd.f32 %v734, %v786
    %v804 = vadd.f32 %v736, %v790
    %v805 = vadd.f32 %v775, %v794
    %v806 = vadd.f32 %v777, %v798
    %v807 = vpack.c.bf16 %v803, %v803
    %v808 = vpack.c.bf16 %v804, %v804
    %v809 = vpack.c.bf16 %v805, %v805
    %v810 = vpack.c.bf16 %v806, %v806
    %v811 = vxor.u32 %v807, 2147516416
    %v813 = vmul.bf16 %v811, 1069105081
    %v814 = vpow.bf16.pop %v813
    %v815 = vadd.bf16 %v814, 1065369472
    %v816 = vrcp.bf16.pop %v815
    %v817 = vmul.bf16 1065369472, %v816
    %v818 = vxor.u32 %v808, 2147516416
    %v820 = vmul.bf16 %v818, 1069105081
    %v821 = vpow.bf16.pop %v820
    %v822 = vadd.bf16 %v821, 1065369472
    %v823 = vrcp.bf16.pop %v822
    %v824 = vmul.bf16 1065369472, %v823
    %v825 = vunpack.c.l.bf16 %v824
    %v826 = vmul.bf16 %v817, %v810
    %v827 = vadd.bf16 %v809, %v826
    %v828 = vtanh.bf16.pop %v827
    %v829 = vunpack.c.l.bf16 %v828
    %v830 = vsub.f32 1.0, %v825
    %v831 = vmul.f32 %v830, %v829
    %v832 = vmul.f32 %v825, %v118
    %v833 = vadd.f32 %v831, %v832
    %v834 = vpack.c.bf16 %v833, %v833
    %v835 = vld [vmem:[#allocation11] sm:$0xff]
    %v836 = vld [vmem:[#allocation11 + $0x8] sm:$0xff]
    %v837 = vld [vmem:[#allocation11 + $0x10] sm:$0xff]
    %v838 = vld [vmem:[#allocation11 + $0x18] sm:$0xff]
    %v839 = vld [vmem:[#allocation11 + $0x20] sm:$0xff]
    %v840 = vld [vmem:[#allocation11 + $0x28] sm:$0xff]
    %v841 = vld [vmem:[#allocation11 + $0x30] sm:$0xff]
    %v842 = vld [vmem:[#allocation11 + $0x38] sm:$0xff]
    %v843 = vld [vmem:[#allocation11 + $0x40] sm:$0xff]
    %v844 = vld [vmem:[#allocation11 + $0x48] sm:$0xff]
    %v845 = vld [vmem:[#allocation11 + $0x50] sm:$0xff]
    %v846 = vld [vmem:[#allocation11 + $0x58] sm:$0xff]
    %v847 = vld [vmem:[#allocation11 + $0x60] sm:$0xff]
    %v848 = vld [vmem:[#allocation11 + $0x68] sm:$0xff]
    %v849 = vld [vmem:[#allocation11 + $0x70] sm:$0xff]
    %v850 = vld [vmem:[#allocation11 + $0x78] sm:$0xff]
    %v851 = vld [vmem:[%s8] sm:$0x3]
    %v853 = vlaneseq
    %v854 = vshrl.u32 %v853, 7
    %v855 = vsub.s32 0, %v854
    %v856 = vrot.slane %v851, %v855
    %v857 = vlaneseq
    %v858 = vshrl.u32 %v857, 7
    %v859 = vsub.s32 1, %v858
    %v860 = vrot.slane %v851, %v859
    %v879 = vunpack.c.l.b16 %v835
    %v880 = vunpack.c.h.b16 %v835
    %v881 = vunpack.c.l.b16 %v836
    %v882 = vunpack.c.h.b16 %v836
    %v883 = vunpack.c.l.b16 %v837
    %v884 = vunpack.c.h.b16 %v837
    %v885 = vunpack.c.l.b16 %v838
    %v886 = vunpack.c.h.b16 %v838
    %v887 = vunpack.c.l.b16 %v839
    %v888 = vunpack.c.h.b16 %v839
    %v889 = vunpack.c.l.b16 %v840
    %v890 = vunpack.c.h.b16 %v840
    %v891 = vunpack.c.l.b16 %v841
    %v892 = vunpack.c.h.b16 %v841
    %v893 = vunpack.c.l.b16 %v842
    %v894 = vunpack.c.h.b16 %v842
    %v895 = vunpack.c.l.b16 %v843
    %v896 = vunpack.c.h.b16 %v843
    %v897 = vunpack.c.l.b16 %v844
    %v898 = vunpack.c.h.b16 %v844
    %v899 = vunpack.c.l.b16 %v845
    %v900 = vunpack.c.h.b16 %v845
    %v901 = vunpack.c.l.b16 %v846
    %v902 = vunpack.c.h.b16 %v846
    %v903 = vunpack.c.l.b16 %v847
    %v904 = vunpack.c.h.b16 %v847
    %v905 = vunpack.c.l.b16 %v848
    %v906 = vunpack.c.h.b16 %v848
    %v907 = vunpack.c.l.b16 %v849
    %v908 = vunpack.c.h.b16 %v849
    %v909 = vunpack.c.l.b16 %v850
    %v910 = vunpack.c.h.b16 %v850
    %v911 = vpack.c.b16 %v881, %v879
    %v912 = vpack.c.b16 %v882, %v880
    %v913 = vpack.c.b16 %v885, %v883
    %v914 = vpack.c.b16 %v886, %v884
    %v915 = vpack.c.b16 %v889, %v887
    %v916 = vpack.c.b16 %v890, %v888
    %v917 = vpack.c.b16 %v893, %v891
    %v918 = vpack.c.b16 %v894, %v892
    %v919 = vpack.c.b16 %v897, %v895
    %v920 = vpack.c.b16 %v898, %v896
    %v921 = vpack.c.b16 %v901, %v899
    %v922 = vpack.c.b16 %v902, %v900
    %v923 = vpack.c.b16 %v905, %v903
    %v924 = vpack.c.b16 %v906, %v904
    %v925 = vpack.c.b16 %v909, %v907
    %v926 = vpack.c.b16 %v910, %v908
    %943 = vmatprep.subr.bf16.mxu0 %v926
    %944 = vmatpush1.bf16.msra.mxu0 %v925
    %945 = vmatprep.subr.bf16.mxu0 %v924
    %946 = vmatpush1.bf16.msra.mxu0 %v923
    %947 = vmatprep.subr.bf16.mxu0 %v922
    %948 = vmatpush1.bf16.msra.mxu0 %v921
    %949 = vmatprep.subr.bf16.mxu0 %v920
    %950 = vmatpush1.bf16.msra.mxu0 %v919
    %951 = vmatprep.subr.bf16.mxu0 %v918
    %952 = vmatpush1.bf16.msra.mxu0 %v917
    %953 = vmatprep.subr.bf16.mxu0 %v916
    %954 = vmatpush1.bf16.msra.mxu0 %v915
    %955 = vmatprep.subr.bf16.mxu0 %v914
    %956 = vmatpush1.bf16.msra.mxu0 %v913
    %957 = vmatprep.subr.bf16.mxu0 %v912
    %958 = vmatpush1.bf16.msra.mxu0 %v911
    %959 = vmatprep.subr.bf16.mxu0 0
    %960 = vmatpush2.bf16.msra.mxu0 0
    %961 = vmatprep.subr.bf16.mxu0 0
    %962 = vmatpush2.bf16.msra.mxu0 0
    %963 = vmatprep.subr.bf16.mxu0 0
    %964 = vmatpush2.bf16.msra.mxu0 0
    %965 = vmatprep.subr.bf16.mxu0 0
    %966 = vmatpush2.bf16.msra.mxu0 0
    %967 = vmatprep.subr.bf16.mxu0 0
    %968 = vmatpush2.bf16.msra.mxu0 0
    %969 = vmatprep.subr.bf16.mxu0 0
    %970 = vmatpush2.bf16.msra.mxu0 0
    %971 = vmatprep.subr.bf16.mxu0 0
    %972 = vmatpush2.bf16.msra.mxu0 0
    %973 = vmatprep.subr.bf16.mxu0 0
    %974 = vmatpush2.bf16.msra.mxu0 0
    %975 = vmatprep.mubr.bf16.mxu0 0
    %976 = vmatmul.mubr.bf16.gmra.mxu0 %v834
    %v977 = vpop.f32.mrf.mxu0
    %v978 = vadd.f32 %v856, %v977
    %v979 = vpop.f32.mrf.mxu0
    %v980 = vadd.f32 %v860, %v979
    %v981 = vpop.f32.mrf.mxu0
    %v982 = vpop.f32.mrf.mxu0
    %983 = vdwg.mxu0
    %v984 = vmax.f32 %v980, 0.0
    %v985 = vand.u32 2147483647, %v980
    %v986 = vsub.f32 0.0, %v985
    %v987 = vmul.f32 %v986, 1.442695
    %v988 = vpow.pop %v987
    %v989 = vadd.f32 %v988, 1.0
    %v990 = vlog2.pop %v989
    %v991 = vmul.f32 %v990, 0.6931472
    %v992 = vmul.f32 -0.5, %v988
    %v993 = vadd.f32 %v992, 1.0
    %v994 = vmul.f32 %v993, %v988
    %v995 = vand.u32 2147483647, %v988
    %vm996 = vcmp.lt.f32.partialorder %v995, 0.0004427343
    %v997 = vsel %vm996, %v994, %v991
    %v998 = vadd.f32 %v984, %v997
    %v999 = vadd.f32 %v998, 0.01
    %1000 = vst [vmem:[#allocation13] sm:$0xff] %v833
    %1001 = vst [vmem:[#allocation14] sm:$0xff] %v978
    %1002 = vst [vmem:[#allocation16] sm:$0xff] %v999
    // Predicated region
    $region62: #{tpu_custom_call.1} parent=1 // pred_check
      _
    $region63: #{tpu_custom_call.1} parent=1 // pred_check_branch
      %1004 = sbr.rel (0) target = $region65
    $region64: #{tpu_custom_call.1} parent=1 // pred_region
      %s1006 = ssub.s32 128, 128
      %1007 = vsyncadd [#allocation4], %s1006
      %s1009 = sshll.u32 [#allocation13], 4
      %s1010 = int_to_ptr.vmem [resolvable:$true] %s1009
      %1012 = dma.vmem_to_hbm [thread:$0]  %s1010, 128, %s9, [#allocation4]
    $region65: #{tpu_custom_call.1} parent=1 // pred_fallthru
      _
    // Predicated region
    $region66: #{tpu_custom_call.1} parent=1 // pred_check
      _
    $region67: #{tpu_custom_call.1} parent=1 // pred_check_branch
      %1014 = sbr.rel (0) target = $region69
    $region68: #{tpu_custom_call.1} parent=1 // pred_region
      %s1016 = ssub.s32 128, 128
      %1017 = vsyncadd [#allocation15], %s1016
      %s1019 = sshll.u32 [#allocation14], 4
      %s1020 = int_to_ptr.vmem [resolvable:$true] %s1019
      %1022 = dma.vmem_to_hbm [thread:$0]  %s1020, 128, %s10, [#allocation15]
    $region69: #{tpu_custom_call.1} parent=1 // pred_fallthru
      _
    // Predicated region
    $region70: #{tpu_custom_call.1} parent=1 // pred_check
      _
    $region71: #{tpu_custom_call.1} parent=1 // pred_check_branch
      %1024 = sbr.rel (0) target = $region73
    $region72: #{tpu_custom_call.1} parent=1 // pred_region
      %s1026 = ssub.s32 128, 128
      %1027 = vsyncadd [#allocation15], %s1026
      %s1029 = sshll.u32 [#allocation16], 4
      %s1030 = int_to_ptr.vmem [resolvable:$true] %s1029
      %1032 = dma.vmem_to_hbm [thread:$0]  %s1030, 128, %s11, [#allocation15]
    $region73: #{tpu_custom_call.1} parent=1 // pred_fallthru
      _
    // Predicated region
    $region74: #{tpu_custom_call.1} parent=1 // pred_check
      _
    $region75: #{tpu_custom_call.1} parent=1 // pred_check_branch
      %1034 = sbr.rel (0) target = $region77
    $region76: #{tpu_custom_call.1} parent=1 // pred_region
      %1035 = dma.done [#allocation4], 128
    $region77: #{tpu_custom_call.1} parent=1 // pred_fallthru
      _
    // Predicated region
    $region78: #{tpu_custom_call.1} parent=1 // pred_check
      _
    $region79: #{tpu_custom_call.1} parent=1 // pred_check_branch
      %1037 = sbr.rel (0) target = $region81
    $region80: #{tpu_custom_call.1} parent=1 // pred_region
      %1038 = dma.done [#allocation15], 128
    $region81: #{tpu_custom_call.1} parent=1 // pred_fallthru
      _
    // Predicated region
    $region82: #{tpu_custom_call.1} parent=1 // pred_check
      _
    $region83: #{tpu_custom_call.1} parent=1 // pred_check_branch
      %1040 = sbr.rel (0) target = $region85
    $region84: #{tpu_custom_call.1} parent=1 // pred_region
      %1041 = dma.done [#allocation15], 128
    $region85: #{tpu_custom_call.1} parent=1 // pred_fallthru
      _
    %1042 = vsyncpa [#allocation3], 1
    %1043 = vsyncpa [#allocation6], 1
    %1044 = vsyncpa [#allocation9], 1
    %1045 = vsyncpa [#allocation12], 1
    %1046 = vsyncpa [#allocation4], 1
    %1047 = vsyncpa [#allocation15], 1

</llo_original>
